<compile_context>
chip_gen: v5e
topology: v5e:2x2
jax: 0.10.0
libtpu: 0.0.40
codegen_flags: <defaults>
</compile_context>

<pallas_src>
import jax
import jax.numpy as jnp
import numpy as np
from jax import lax
from jax.experimental import pallas as pl
from jax.experimental.pallas import tpu as pltpu

# top-k sizes exactly as in the PyTorch module
ABN_HARD_K = 10       # topk(|score-0.5|, largest=False)
ABN_CONF_NOR_K = 5    # topk(score, largest=False)
ABN_CONF_ABN_K = 10   # topk(score, largest=True)
NOR_HARD_K = 10       # topk(score, largest=True)
NOR_CONF_NOR_K = 10   # topk(score, largest=False)

K_PAD = 32            # sum(K) (25 abnormal / 20 normal) padded to a sublane multiple
_HI = lax.Precision.HIGHEST


def _pick_bt(B, T):
    """Batch rows per grid step: amortize per-step overhead, but cap so the
    O(Bt*T^2) comparison temporaries stay comfortably in vregs/VMEM."""
    cap = max(1, (128 * 128) // max(T * T, 1))
    cap = min(cap, 8, B)
    for d in range(cap, 0, -1):
        if B % d == 0:
            return d
    return 1


def _make_kernel(abnormal, feat_precision):
    def kernel(feat_ref, gsrc_ref, scol_ref, fout_ref, sout_ref):
        featv = feat_ref[...]                          # (Bt, T, F) native dtype
        gsrc = gsrc_ref[...]                           # (Bt, 2, T) f32: [score; iota]
        scol = scol_ref[...]                           # (Bt, T, 1) f32
        Bt, T, _ = scol.shape

        score_row = gsrc[:, 0:1, :]                    # (Bt, 1, T)

        # shared index helpers over the (T, T) comparison plane (j=sublane, i=lane)
        iota_i = lax.broadcasted_iota(jnp.int32, (1, T, T), 2)
        iota_j = lax.broadcasted_iota(jnp.int32, (1, T, T), 1)
        j_before_i = iota_j < iota_i                   # ties -> lower index wins

        def rank_of(beats, tie):
            # rank[i] = #{j beating i} + #{equal keys before i}  (torch.topk order)
            return jnp.sum((beats | tie).astype(jnp.float32), axis=1, keepdims=True)

        # score comparisons shared by the ascending and descending selections
        si = jnp.broadcast_to(score_row, (Bt, T, T))   # [b, j, i] = score[b, i]
        sj = jnp.broadcast_to(scol, (Bt, T, T))        # [b, j, i] = score[b, j]
        tie_s = (sj == si) & j_before_i
        rank_asc = rank_of(sj < si, tie_s)             # (Bt,1,T) smallest-score-first
        rank_desc = rank_of(sj > si, tie_s)            # (Bt,1,T) largest-score-first

        # fused one-hot selection matrix P (Bt, K_PAD, T): row k selects the
        # k-th output snippet; segment layout depends on the branch.
        kf = lax.broadcasted_iota(jnp.int32, (Bt, K_PAD, T), 1).astype(jnp.float32)
        asc_b = jnp.broadcast_to(rank_asc, (Bt, K_PAD, T))
        desc_b = jnp.broadcast_to(rank_desc, (Bt, K_PAD, T))

        if abnormal:
            # hard: 10 smallest |score - 0.5| (torch.abs_ only touches the temporary)
            arow = jnp.abs(score_row - jnp.float32(0.5))
            acol = jnp.abs(scol - jnp.float32(0.5))
            ai = jnp.broadcast_to(arow, (Bt, T, T))
            aj = jnp.broadcast_to(acol, (Bt, T, T))
            tie_a = (aj == ai) & j_before_i
            rank_hard = rank_of(aj < ai, tie_a)
            hard_b = jnp.broadcast_to(rank_hard, (Bt, K_PAD, T))
            o1 = float(ABN_CONF_NOR_K)                        # 5
            o2 = float(ABN_CONF_NOR_K + ABN_CONF_ABN_K)       # 15
            n_valid = o2 + float(ABN_HARD_K)                  # 25
            target = jnp.where(kf < o1, asc_b,
                               jnp.where(kf < o2, desc_b + o1, hard_b + o2))
        else:
            o1 = float(NOR_CONF_NOR_K)                        # 10
            n_valid = o1 + float(NOR_HARD_K)                  # 20
            target = jnp.where(kf < o1, asc_b, desc_b + o1)

        # exact small-integer equality; rows >= n_valid stay all-zero (padding)
        P = ((kf == target) & (kf < n_valid)).astype(jnp.float32)   # (Bt, K_PAD, T)

        # one batched MXU gather for all selected feature rows (exact: one-hot P)
        fsel = jnp.einsum('bkt,btf->bkf', P.astype(featv.dtype), featv,
                          precision=feat_precision,
                          preferred_element_type=jnp.float32)       # (Bt, K_PAD, F)
        # one tiny MXU gather: row 0 = gathered scores, row 1 = gathered indices
        ssel = jnp.einsum('bct,bkt->bck', gsrc, P,
                          precision=_HI,
                          preferred_element_type=jnp.float32)       # (Bt, 2, K_PAD)

        fout_ref[...] = fsel.astype(fout_ref.dtype)
        sout_ref[...] = ssel

    return kernel


def sample_generator_forward(feat, score, type='Abnormal'):
    """Pallas implementation of Sample_generator.forward.

    feat : (B, T, F) float32 (or bfloat16)
    score: (B, T)    float32
    Indices are returned as int32 (torch.topk would return int64).
    """
    B, T, Fd = feat.shape
    assert score.shape == (B, T)
    assert T >= 10, "top-k sizes require at least 10 snippets along dim 1"
    assert T <= 2048, "O(T^2) rank path; use a two-phase rank-then-gather design"

    abnormal = (type == 'Abnormal')
    Bt = _pick_bt(B, T)

    # wrapper-side layout plumbing (free XLA prep):
    #   gsrc (B, 2, T): row 0 = score, row 1 = snippet index (exact ints in f32)
    #   scol (B, T, 1): score in column orientation for the (T,T) comparisons
    score_f32 = score.astype(jnp.float32)
    iota_t = jnp.arange(T, dtype=jnp.float32)
    gsrc = jnp.stack([score_f32, jnp.broadcast_to(iota_t, (B, T))], axis=1)
    scol = score_f32[:, :, None]

    # HIGHEST keeps the one-hot gather bit-exact for f32 feat; bf16 feat is
    # exact with a single default-precision MXU pass (review item).
    feat_precision = lax.Precision.DEFAULT if feat.dtype == jnp.bfloat16 else _HI

    fslab, sslab = pl.pallas_call(
        _make_kernel(abnormal, feat_precision),
        grid=(B // Bt,),
        in_specs=[
            pl.BlockSpec((Bt, T, Fd), lambda g: (g, 0, 0)),
            pl.BlockSpec((Bt, 2, T), lambda g: (g, 0, 0)),
            pl.BlockSpec((Bt, T, 1), lambda g: (g, 0, 0)),
        ],
        out_specs=(
            pl.BlockSpec((Bt, K_PAD, Fd), lambda g: (g, 0, 0)),
            pl.BlockSpec((Bt, 2, K_PAD), lambda g: (g, 0, 0)),
        ),
        out_shape=(
            jax.ShapeDtypeStruct((B, K_PAD, Fd), feat.dtype),   # consolidated feat slab
            jax.ShapeDtypeStruct((B, 2, K_PAD), jnp.float32),   # [scores; indices] slab
        ),
        compiler_params=pltpu.CompilerParams(
            # Batch-block axis is embarrassingly parallel (megacore sharding on
            # v7x; harmless on single-TC v5e/v6e).  Per-step working set is
            # ~2 * (Bt*T*F + Bt*K_PAD*F) * 4 B double-buffered, well under the
            # 32 MiB scoped-VMEM default on every generation (incl. v7x 64 MiB
            # physical), so no vmem_limit_bytes override is needed.
            dimension_semantics=("parallel",)),
    )(feat, gsrc, scol)

    # cheap XLA slices to un-pad / split the consolidated slabs
    scores = sslab[:, 0, :]
    idx = jnp.rint(sslab[:, 1, :]).astype(jnp.int32)   # exact integers for T < 2**24

    if abnormal:
        o1 = ABN_CONF_NOR_K
        o2 = o1 + ABN_CONF_ABN_K
        o3 = o2 + ABN_HARD_K
        return (fslab[:, 0:o1, :], scores[:, 0:o1].astype(score.dtype), idx[:, 0:o1],
                fslab[:, o1:o2, :], scores[:, o1:o2].astype(score.dtype),
                fslab[:, o2:o3, :], scores[:, o2:o3].astype(score.dtype), idx[:, o2:o3])
    else:
        o1 = NOR_CONF_NOR_K
        o2 = o1 + NOR_HARD_K
        return (fslab[:, 0:o1, :], scores[:, 0:o1].astype(score.dtype),
                fslab[:, o1:o2, :], scores[:, o1:o2].astype(score.dtype))


# ---------------- pure-JAX reference (for a sanity check) ----------------
def _ref_abnormal(feat, score):
    B, T, Fd = feat.shape
    _, idx_nor = lax.top_k(-score, ABN_CONF_NOR_K)
    _, idx_abn = lax.top_k(score, ABN_CONF_ABN_K)
    _, idx_hard = lax.top_k(-jnp.abs(score - 0.5), ABN_HARD_K)

    def gf(idx):
        return jnp.take_along_axis(
            feat, jnp.broadcast_to(idx[:, :, None], (B, idx.shape[1], Fd)), axis=1)

    def gs(idx):
        return jnp.take_along_axis(score, idx, axis=1)

    return (gf(idx_nor), gs(idx_nor), idx_nor,
            gf(idx_abn), gs(idx_abn),
            gf(idx_hard), gs(idx_hard), idx_hard)


def _ref_normal(feat, score):
    B, T, Fd = feat.shape
    _, idx_nor = lax.top_k(-score, NOR_CONF_NOR_K)
    _, idx_hard = lax.top_k(score, NOR_HARD_K)

    def gf(idx):
        return jnp.take_along_axis(
            feat, jnp.broadcast_to(idx[:, :, None], (B, idx.shape[1], Fd)), axis=1)

    def gs(idx):
        return jnp.take_along_axis(score, idx, axis=1)

    return (gf(idx_nor), gs(idx_nor), gf(idx_hard), gs(idx_hard))


if __name__ == "__main__":
    # Sample_generator has no learnable parameters; inputs only.
    B, T, Fd = 2, 16, 32   # T >= 10 required by the top-k sizes
    key = jax.random.PRNGKey(0)
    kf, ks = jax.random.split(key)
    feat = jax.random.normal(kf, (B, T, Fd), dtype=jnp.float32)
    score = jax.random.uniform(ks, (B, T), dtype=jnp.float32)  # scores in [0, 1)

    # --- Abnormal branch (default) ---
    outs_abn = jax.block_until_ready(sample_generator_forward(feat, score, 'Abnormal'))
    ref_abn = _ref_abnormal(feat, score)
    for got, want in zip(outs_abn, ref_abn):
        if jnp.issubdtype(got.dtype, jnp.integer):
            np.testing.assert_array_equal(np.asarray(got), np.asarray(want))
        else:
            np.testing.assert_allclose(np.asarray(got), np.asarray(want),
                                       rtol=1e-6, atol=1e-6)

    # --- Normal branch ---
    outs_nor = jax.block_until_ready(sample_generator_forward(feat, score, 'Normal'))
    ref_nor = _ref_normal(feat, score)
    for got, want in zip(outs_nor, ref_nor):
        np.testing.assert_allclose(np.asarray(got), np.asarray(want),
                                   rtol=1e-6, atol=1e-6)

    print("KERNEL_OK")
</pallas_src>

<mosaic_0001>
module attributes {stable_mosaic.version = 11 : i64} {
  func.func @kernel(%arg0: i32, %arg1: memref<2x16x32xf32, #tpu.memory_space<vmem>>, %arg2: memref<2x2x16xf32, #tpu.memory_space<vmem>>, %arg3: memref<2x16x1xf32, #tpu.memory_space<vmem>>, %arg4: memref<2x32x32xf32, #tpu.memory_space<vmem>>, %arg5: memref<2x2x32xf32, #tpu.memory_space<vmem>>) attributes {dimension_semantics = [#tpu.dimension_semantics<parallel>], iteration_bounds = array<i64: 1>, scalar_prefetch = 0 : i64, scratch_operands = 0 : i64, tpu.core_type = #tpu.core_type<tc>, window_params = [{transform_indices = @transform_0, window_bounds = array<i64: 2, 16, 32>}, {transform_indices = @transform_1, window_bounds = array<i64: 2, 2, 16>}, {transform_indices = @transform_2, window_bounds = array<i64: 2, 16, 1>}, {transform_indices = @transform_3, window_bounds = array<i64: 2, 32, 32>}, {transform_indices = @transform_4, window_bounds = array<i64: 2, 2, 32>}]} {
    %c0 = arith.constant 0 : index
    %c0_0 = arith.constant 0 : index
    %c0_1 = arith.constant 0 : index
    %0 = vector.load %arg1[%c0, %c0_0, %c0_1] : memref<2x16x32xf32, #tpu.memory_space<vmem>>, vector<2x16x32xf32>
    %c0_2 = arith.constant 0 : index
    %c0_3 = arith.constant 0 : index
    %c0_4 = arith.constant 0 : index
    %1 = vector.load %arg2[%c0_2, %c0_3, %c0_4] : memref<2x2x16xf32, #tpu.memory_space<vmem>>, vector<2x2x16xf32>
    %c0_5 = arith.constant 0 : index
    %c0_6 = arith.constant 0 : index
    %c0_7 = arith.constant 0 : index
    %2 = vector.load %arg3[%c0_5, %c0_6, %c0_7] : memref<2x16x1xf32, #tpu.memory_space<vmem>>, vector<2x16x1xf32>
    %3 = vector.extract_strided_slice %1 {offsets = [0, 0, 0], sizes = [2, 1, 16], strides = [1, 1, 1]} : vector<2x2x16xf32> to vector<2x1x16xf32>
    %4 = tpu.iota {dimensions = array<i32: 2>} : vector<1x16x16xi32>
    %5 = tpu.iota {dimensions = array<i32: 1>} : vector<1x16x16xi32>
    %6 = arith.cmpi slt, %5, %4 : vector<1x16x16xi32>
    %7 = vector.shape_cast %3 : vector<2x1x16xf32> to vector<2x1x16xf32>
    %8 = vector.broadcast %7 : vector<2x1x16xf32> to vector<2x16x16xf32>
    %9 = vector.shape_cast %2 : vector<2x16x1xf32> to vector<2x16x1xf32>
    %10 = vector.broadcast %9 : vector<2x16x1xf32> to vector<2x16x16xf32>
    %11 = arith.cmpf oeq, %10, %8 : vector<2x16x16xf32>
    %12 = vector.broadcast %6 : vector<1x16x16xi1> to vector<2x16x16xi1>
    %13 = arith.andi %11, %12 : vector<2x16x16xi1>
    %14 = arith.cmpf olt, %10, %8 : vector<2x16x16xf32>
    %15 = arith.ori %14, %13 : vector<2x16x16xi1>
    %16 = arith.extui %15 : vector<2x16x16xi1> to vector<2x16x16xi32>
    %17 = arith.sitofp %16 : vector<2x16x16xi32> to vector<2x16x16xf32>
    %cst = arith.constant dense<0.000000e+00> : vector<2x16xf32>
    %18 = vector.multi_reduction <add>, %17, %cst [1] : vector<2x16x16xf32> to vector<2x16xf32>
    %19 = vector.shape_cast %18 : vector<2x16xf32> to vector<2x1x16xf32>
    %20 = arith.cmpf ogt, %10, %8 : vector<2x16x16xf32>
    %21 = arith.ori %20, %13 : vector<2x16x16xi1>
    %22 = arith.extui %21 : vector<2x16x16xi1> to vector<2x16x16xi32>
    %23 = arith.sitofp %22 : vector<2x16x16xi32> to vector<2x16x16xf32>
    %cst_8 = arith.constant dense<0.000000e+00> : vector<2x16xf32>
    %24 = vector.multi_reduction <add>, %23, %cst_8 [1] : vector<2x16x16xf32> to vector<2x16xf32>
    %25 = vector.shape_cast %24 : vector<2x16xf32> to vector<2x1x16xf32>
    %26 = tpu.iota {dimensions = array<i32: 1>} : vector<2x32x16xi32>
    %27 = arith.sitofp %26 : vector<2x32x16xi32> to vector<2x32x16xf32>
    %28 = vector.shape_cast %19 : vector<2x1x16xf32> to vector<2x1x16xf32>
    %29 = vector.broadcast %28 : vector<2x1x16xf32> to vector<2x32x16xf32>
    %30 = vector.shape_cast %25 : vector<2x1x16xf32> to vector<2x1x16xf32>
    %31 = vector.broadcast %30 : vector<2x1x16xf32> to vector<2x32x16xf32>
    %cst_9 = arith.constant 5.000000e-01 : f32
    %32 = vector.broadcast %cst_9 : f32 to vector<2x1x16xf32>
    %33 = arith.subf %3, %32 : vector<2x1x16xf32>
    %34 = math.absf %33 : vector<2x1x16xf32>
    %cst_10 = arith.constant 5.000000e-01 : f32
    %35 = vector.broadcast %cst_10 : f32 to vector<2x16x1xf32>
    %36 = arith.subf %2, %35 : vector<2x16x1xf32>
    %37 = math.absf %36 : vector<2x16x1xf32>
    %38 = vector.shape_cast %34 : vector<2x1x16xf32> to vector<2x1x16xf32>
    %39 = vector.broadcast %38 : vector<2x1x16xf32> to vector<2x16x16xf32>
    %40 = vector.shape_cast %37 : vector<2x16x1xf32> to vector<2x16x1xf32>
    %41 = vector.broadcast %40 : vector<2x16x1xf32> to vector<2x16x16xf32>
    %42 = arith.cmpf oeq, %41, %39 : vector<2x16x16xf32>
    %43 = vector.broadcast %6 : vector<1x16x16xi1> to vector<2x16x16xi1>
    %44 = arith.andi %42, %43 : vector<2x16x16xi1>
    %45 = arith.cmpf olt, %41, %39 : vector<2x16x16xf32>
    %46 = arith.ori %45, %44 : vector<2x16x16xi1>
    %47 = arith.extui %46 : vector<2x16x16xi1> to vector<2x16x16xi32>
    %48 = arith.sitofp %47 : vector<2x16x16xi32> to vector<2x16x16xf32>
    %cst_11 = arith.constant dense<0.000000e+00> : vector<2x16xf32>
    %49 = vector.multi_reduction <add>, %48, %cst_11 [1] : vector<2x16x16xf32> to vector<2x16xf32>
    %50 = vector.shape_cast %49 : vector<2x16xf32> to vector<2x1x16xf32>
    %51 = vector.shape_cast %50 : vector<2x1x16xf32> to vector<2x1x16xf32>
    %52 = vector.broadcast %51 : vector<2x1x16xf32> to vector<2x32x16xf32>
    %cst_12 = arith.constant 5.000000e+00 : f32
    %53 = vector.broadcast %cst_12 : f32 to vector<2x32x16xf32>
    %54 = arith.cmpf olt, %27, %53 : vector<2x32x16xf32>
    %cst_13 = arith.constant 1.500000e+01 : f32
    %55 = vector.broadcast %cst_13 : f32 to vector<2x32x16xf32>
    %56 = arith.cmpf olt, %27, %55 : vector<2x32x16xf32>
    %cst_14 = arith.constant 5.000000e+00 : f32
    %57 = vector.broadcast %cst_14 : f32 to vector<2x32x16xf32>
    %58 = arith.addf %31, %57 : vector<2x32x16xf32>
    %cst_15 = arith.constant 1.500000e+01 : f32
    %59 = vector.broadcast %cst_15 : f32 to vector<2x32x16xf32>
    %60 = arith.addf %52, %59 : vector<2x32x16xf32>
    %61 = arith.select %56, %58, %60 : vector<2x32x16xi1>, vector<2x32x16xf32>
    %62 = arith.select %54, %29, %61 : vector<2x32x16xi1>, vector<2x32x16xf32>
    %63 = arith.cmpf oeq, %27, %62 : vector<2x32x16xf32>
    %cst_16 = arith.constant 2.500000e+01 : f32
    %64 = vector.broadcast %cst_16 : f32 to vector<2x32x16xf32>
    %65 = arith.cmpf olt, %27, %64 : vector<2x32x16xf32>
    %66 = arith.andi %63, %65 : vector<2x32x16xi1>
    %67 = arith.extui %66 : vector<2x32x16xi1> to vector<2x32x16xi32>
    %68 = arith.sitofp %67 : vector<2x32x16xi32> to vector<2x32x16xf32>
    "tpu.trace_start"() <{level = 10 : i32, message = "bkt,btf->bkf"}> : () -> ()
    %cst_17 = arith.constant dense<0.000000e+00> : vector<2x32x32xf32>
    %69 = tpu.matmul %68, %0, %cst_17 {dimension_numbers = #tpu.dot_dimension_numbers<[2], [1], [1], [2], [0, 0, 0, 1, 1, 2], [0], [0]>, precision = #tpu.contract_precision<fp32>} : vector<2x32x16xf32>, vector<2x16x32xf32>, vector<2x32x32xf32> -> vector<2x32x32xf32>
    "tpu.trace_stop"() : () -> ()
    "tpu.trace_start"() <{level = 10 : i32, message = "bct,bkt->bck"}> : () -> ()
    %cst_18 = arith.constant dense<0.000000e+00> : vector<2x2x32xf32>
    %70 = tpu.matmul %1, %68, %cst_18 {dimension_numbers = #tpu.dot_dimension_numbers<[2], [2], [1], [1], [0, 0, 0, 1, 1, 1], [0], [0]>, precision = #tpu.contract_precision<fp32>} : vector<2x2x16xf32>, vector<2x32x16xf32>, vector<2x2x32xf32> -> vector<2x2x32xf32>
    "tpu.trace_stop"() : () -> ()
    %c0_19 = arith.constant 0 : index
    %c0_20 = arith.constant 0 : index
    %c0_21 = arith.constant 0 : index
    %71 = vector.load %arg4[%c0_19, %c0_20, %c0_21] : memref<2x32x32xf32, #tpu.memory_space<vmem>>, vector<2x32x32xf32>
    tpu.vector_store %arg4[%c0_19, %c0_20, %c0_21], %69 {strides = array<i32>} : memref<2x32x32xf32, #tpu.memory_space<vmem>>, vector<2x32x32xf32>,
    %c0_22 = arith.constant 0 : index
    %c0_23 = arith.constant 0 : index
    %c0_24 = arith.constant 0 : index
    %72 = vector.load %arg5[%c0_22, %c0_23, %c0_24] : memref<2x2x32xf32, #tpu.memory_space<vmem>>, vector<2x2x32xf32>
    tpu.vector_store %arg5[%c0_22, %c0_23, %c0_24], %70 {strides = array<i32>} : memref<2x2x32xf32, #tpu.memory_space<vmem>>, vector<2x2x32xf32>,
    return
  }
  func.func @transform_0(%arg0: i32) -> (i32, i32, i32) {
    %c0_i32 = arith.constant 0 : i32
    %c0_i32_0 = arith.constant 0 : i32
    %c0_i32_1 = arith.constant 0 : i32
    return %arg0, %c0_i32, %c0_i32_0 : i32, i32, i32
  }
  func.func @transform_1(%arg0: i32) -> (i32, i32, i32) {
    %c0_i32 = arith.constant 0 : i32
    %c0_i32_0 = arith.constant 0 : i32
    %c0_i32_1 = arith.constant 0 : i32
    return %arg0, %c0_i32, %c0_i32_0 : i32, i32, i32
  }
  func.func @transform_2(%arg0: i32) -> (i32, i32, i32) {
    %c0_i32 = arith.constant 0 : i32
    %c0_i32_0 = arith.constant 0 : i32
    %c0_i32_1 = arith.constant 0 : i32
    return %arg0, %c0_i32, %c0_i32_0 : i32, i32, i32
  }
  func.func @transform_3(%arg0: i32) -> (i32, i32, i32) {
    %c0_i32 = arith.constant 0 : i32
    %c0_i32_0 = arith.constant 0 : i32
    %c0_i32_1 = arith.constant 0 : i32
    return %arg0, %c0_i32, %c0_i32_0 : i32, i32, i32
  }
  func.func @transform_4(%arg0: i32) -> (i32, i32, i32) {
    %c0_i32 = arith.constant 0 : i32
    %c0_i32_0 = arith.constant 0 : i32
    %c0_i32_1 = arith.constant 0 : i32
    return %arg0, %c0_i32, %c0_i32_0 : i32, i32, i32
  }
}

</mosaic_0001>

<llo_original>
// kernel: tpu_custom_call.1
$region0: #{tpu_custom_call.1}
  #allocation0 [shape = 'u32[]', space=smem, size = 0x4, offset = 0x4, fixed_abs, tag = 'smem constant byte address 0x4 - core index']
  #allocation1 [shape = 'u32[72,128]{1,0:T(1,128)}', space=vmem, size = 0x9000, scoped, tag = 'internal scratch']
  %s0 = inlined_call_operand.vmem [shape: f32[2,16,32], index: 0, kind: input, shape index: {}]
  %s1 = inlined_call_operand.hbm [shape: f32[2,2,16], index: 1, kind: input, shape index: {}]
  %s2 = inlined_call_operand.vmem [shape: f32[2,16,1], index: 2, kind: input, shape index: {}]
  %s3 = inlined_call_operand.hbm [shape: f32[2,32,32], index: 3, kind: output, shape index: {0}]
  %s4 = inlined_call_operand.hbm [shape: f32[2,2,32], index: 4, kind: output, shape index: {1}]
  %5 = xla_tuple %s3, %s4
  %s6 = sld [smem:[#allocation0]]
  $region34: #{tpu_custom_call.1} parent=0
    _
  %s8 = ssub.s32 1, %s6
  %s9 = scalar_select 0, %s8, %s6
  $region1: #{tpu_custom_call.1} parent=0
    #allocation2 [shape = 'u8[2048]{0}', space=vmem, size = 0x800, scoped, tag = 'input window, operand 1, single buffered']
    #allocation3 [shape = 's32[1]{0}', space=sflag, size = 0x4, scoped, tag = 'scoped memory for tpu_custom_call.1']
    #allocation4 [shape = 's32[1]{0}', space=sflag, size = 0x4, scoped, tag = 'scoped memory for tpu_custom_call.1']
    #allocation5 [shape = 'u8[32768]{0}', space=vmem, size = 0x8000, scoped, tag = 'output window, operand 0, single buffered']
    #allocation6 [shape = 'u8[2048]{0}', space=vmem, size = 0x800, scoped, tag = 'output window, operand 1, single buffered']
    #allocation7 [shape = 's32[1]{0}', space=sflag, size = 0x4, scoped, tag = 'scoped memory for tpu_custom_call.1']
    %10 = vsyncpa [#allocation3], 0
    %11 = vsyncpa [#allocation4], 0
    %12 = vsyncpa [#allocation7], 0
    // Predicated region
    $region2: #{tpu_custom_call.1} parent=1 // pred_check
      _
    $region3: #{tpu_custom_call.1} parent=1 // pred_check_branch
      %14 = sbr.rel (0) target = $region5
    $region4: #{tpu_custom_call.1} parent=1 // pred_region
      _
    $region5: #{tpu_custom_call.1} parent=1 // pred_fallthru
      _
    // Predicated region
    $region6: #{tpu_custom_call.1} parent=1 // pred_check
      _
    $region7: #{tpu_custom_call.1} parent=1 // pred_check_branch
      %16 = sbr.rel (0) target = $region9
    $region8: #{tpu_custom_call.1} parent=1 // pred_region
      %18 = vsyncadd [#allocation3], 0
      %s19 = sshll.u32 %s1, 4
      %s20 = int_to_ptr.hbm [resolvable:$true] %s19
      %s21 = sshll.u32 [#allocation2], 4
      %s22 = int_to_ptr.vmem [resolvable:$true] %s21
      %27 = dma.hbm_to_vmem [thread:$0]  %s20, 64, %s22, [#allocation3], 32, 32, 2
    $region9: #{tpu_custom_call.1} parent=1 // pred_fallthru
      _
    // Predicated region
    $region10: #{tpu_custom_call.1} parent=1 // pred_check
      _
    $region11: #{tpu_custom_call.1} parent=1 // pred_check_branch
      %29 = sbr.rel (0) target = $region13
    $region12: #{tpu_custom_call.1} parent=1 // pred_region
      _
    $region13: #{tpu_custom_call.1} parent=1 // pred_fallthru
      _
    // Predicated region
    $region14: #{tpu_custom_call.1} parent=1 // pred_check
      _
    $region15: #{tpu_custom_call.1} parent=1 // pred_check_branch
      %31 = sbr.rel (0) target = $region17
    $region16: #{tpu_custom_call.1} parent=1 // pred_region
      %33 = dma.done [#allocation3], 64
    $region17: #{tpu_custom_call.1} parent=1 // pred_fallthru
      _
    %v34 = vld [vmem:[%s0] sm:$0xff]
    %v35 = vld [vmem:[%s0 + $0x8] sm:$0xff]
    %v36 = vld [vmem:[%s0 + $0x10] sm:$0xff]
    %v37 = vld [vmem:[%s0 + $0x18] sm:$0xff]
    %v38 = vld [vmem:[#allocation2] sm:$0x3]
    %v39 = vld [vmem:[#allocation2 + $0x2] sm:$0x3]
    %v40 = vld [vmem:[%s2] sm:$0xff]
    %v41 = vld [vmem:[%s2 + $0x8] sm:$0xff]
    %v42 = vld [vmem:[%s2 + $0x10] sm:$0xff]
    %v43 = vld [vmem:[%s2 + $0x18] sm:$0xff]
    %v44 = vlaneseq
    %v45 = vand.u32 %v44, 127
    %v46 = vlaneseq
    %v47 = vshrl.u32 %v46, 7
    %v48 = vadd.s32 %v47, 8
    %vm49 = vcmp.lt.s32.totalorder %v47, %v45
    %vm50 = vcmp.lt.s32.totalorder %v48, %v45
    %v51 = vperm.slane %v38, 0
    %v52 = vperm.slane %v39, 0
    %54 = vset.pattern.permute.xlu0 0
    %55 = vperm.xlu0 %54, %v40
    %v56 = vpop.permute.xlu0 %55
    %59 = vset.pattern.permute.xlu0 0
    %60 = vperm.xlu0 %59, %v41
    %v61 = vpop.permute.xlu0 %60
    %64 = vset.pattern.permute.xlu0 0
    %65 = vperm.xlu0 %64, %v42
    %v66 = vpop.permute.xlu0 %65
    %69 = vset.pattern.permute.xlu0 0
    %70 = vperm.xlu0 %69, %v43
    %v71 = vpop.permute.xlu0 %70
    %vm73 = vcmp.eq.f32.partialorder %v56, %v51
    %vm74 = vcmp.eq.f32.partialorder %v61, %v51
    %vm75 = vcmp.eq.f32.partialorder %v66, %v52
    %vm76 = vcmp.eq.f32.partialorder %v71, %v52
    %v77 = vsel %vm49, 1, 0
    %v78 = vsel %vm50, 1, 0
    %vm79 = vcmp.eq.s32.totalorder %v77, 1
    %vm80 = vcmp.eq.s32.totalorder %v78, 1
    %vm81 = vmand %vm73, %vm79
    %vm82 = vmand %vm74, %vm80
    %vm83 = vmand %vm75, %vm79
    %vm84 = vmand %vm76, %vm80
    %vm85 = vcmp.lt.f32.partialorder %v56, %v51
    %vm86 = vcmp.lt.f32.partialorder %v61, %v51
    %vm87 = vcmp.lt.f32.partialorder %v66, %v52
    %vm88 = vcmp.lt.f32.partialorder %v71, %v52
    %vm89 = vmor %vm85, %vm81
    %vm90 = vmor %vm86, %vm82
    %vm91 = vmor %vm87, %vm83
    %vm92 = vmor %vm88, %vm84
    %v93 = vsel %vm89, 1, 0
    %v94 = vsel %vm90, 1, 0
    %v95 = vsel %vm91, 1, 0
    %v96 = vsel %vm92, 1, 0
    %v97 = vcvt.s32.f32 %v93
    %v98 = vcvt.s32.f32 %v94
    %v99 = vcvt.s32.f32 %v95
    %v100 = vcvt.s32.f32 %v96
    %vm101 = vcmask 130048
    %v102 = vsel %vm101, %v97, 0.0
    %v103 = vsel %vm101, %v98, 0.0
    %v104 = vadd.f32 %v102, %v103
    %v105 = vrot.slane %v104, 4
    %v106 = vadd.f32 %v104, %v105
    %v107 = vrot.slane %v106, 2
    %v108 = vadd.f32 %v106, %v107
    %v109 = vrot.slane %v108, 1
    %v110 = vadd.f32 %v108, %v109
    %v111 = vsel %vm101, %v99, 0.0
    %v112 = vsel %vm101, %v100, 0.0
    %v113 = vadd.f32 %v111, %v112
    %v114 = vrot.slane %v113, 4
    %v115 = vadd.f32 %v113, %v114
    %v116 = vrot.slane %v115, 2
    %v117 = vadd.f32 %v115, %v116
    %v118 = vrot.slane %v117, 1
    %v119 = vadd.f32 %v117, %v118
    %vm120 = vcmp.gt.f32.partialorder %v56, %v51
    %vm121 = vcmp.gt.f32.partialorder %v61, %v51
    %vm122 = vcmp.gt.f32.partialorder %v66, %v52
    %vm123 = vcmp.gt.f32.partialorder %v71, %v52
    %vm124 = vmor %vm120, %vm81
    %vm125 = vmor %vm121, %vm82
    %vm126 = vmor %vm122, %vm83
    %vm127 = vmor %vm123, %vm84
    %v128 = vsel %vm124, 1, 0
    %v129 = vsel %vm125, 1, 0
    %v130 = vsel %vm126, 1, 0
    %v131 = vsel %vm127, 1, 0
    %v132 = vcvt.s32.f32 %v128
    %v133 = vcvt.s32.f32 %v129
    %v134 = vcvt.s32.f32 %v130
    %v135 = vcvt.s32.f32 %v131
    %v136 = vsel %vm101, %v132, 0.0
    %v137 = vsel %vm101, %v133, 0.0
    %v138 = vadd.f32 %v136, %v137
    %v139 = vrot.slane %v138, 4
    %v140 = vadd.f32 %v138, %v139
    %v141 = vrot.slane %v140, 2
    %v142 = vadd.f32 %v140, %v141
    %v143 = vrot.slane %v142, 1
    %v144 = vadd.f32 %v142, %v143
    %v145 = vsel %vm101, %v134, 0.0
    %v146 = vsel %vm101, %v135, 0.0
    %v147 = vadd.f32 %v145, %v146
    %v148 = vrot.slane %v147, 4
    %v149 = vadd.f32 %v147, %v148
    %v150 = vrot.slane %v149, 2
    %v151 = vadd.f32 %v149, %v150
    %v152 = vrot.slane %v151, 1
    %v153 = vadd.f32 %v151, %v152
    %v154 = vadd.s32 %v47, 16
    %v155 = vadd.s32 %v47, 24
    %v156 = vcvt.s32.f32 %v47
    %v157 = vcvt.s32.f32 %v48
    %v158 = vcvt.s32.f32 %v154
    %v159 = vcvt.s32.f32 %v155
    %v160 = vsub.f32 %v38, 0.5
    %v161 = vsub.f32 %v39, 0.5
    %v162 = vand.u32 2147483647, %v160
    %v163 = vand.u32 2147483647, %v161
    %v164 = vsub.f32 %v40, 0.5
    %v165 = vsub.f32 %v41, 0.5
    %v166 = vsub.f32 %v42, 0.5
    %v167 = vsub.f32 %v43, 0.5
    %v168 = vand.u32 2147483647, %v164
    %v169 = vand.u32 2147483647, %v165
    %v170 = vand.u32 2147483647, %v166
    %v171 = vand.u32 2147483647, %v167
    %v172 = vperm.slane %v162, 0
    %v173 = vperm.slane %v163, 0
    %175 = vset.pattern.permute.xlu0 0
    %176 = vperm.xlu0 %175, %v168
    %v177 = vpop.permute.xlu0 %176
    %180 = vset.pattern.permute.xlu0 0
    %181 = vperm.xlu0 %180, %v169
    %v182 = vpop.permute.xlu0 %181
    %185 = vset.pattern.permute.xlu0 0
    %186 = vperm.xlu0 %185, %v170
    %v187 = vpop.permute.xlu0 %186
    %190 = vset.pattern.permute.xlu0 0
    %191 = vperm.xlu0 %190, %v171
    %v192 = vpop.permute.xlu0 %191
    %vm194 = vcmp.eq.f32.partialorder %v177, %v172
    %vm195 = vcmp.eq.f32.partialorder %v182, %v172
    %vm196 = vcmp.eq.f32.partialorder %v187, %v173
    %vm197 = vcmp.eq.f32.partialorder %v192, %v173
    %vm198 = vmand %vm194, %vm79
    %vm199 = vmand %vm195, %vm80
    %vm200 = vmand %vm196, %vm79
    %vm201 = vmand %vm197, %vm80
    %vm202 = vcmp.lt.f32.partialorder %v177, %v172
    %vm203 = vcmp.lt.f32.partialorder %v182, %v172
    %vm204 = vcmp.lt.f32.partialorder %v187, %v173
    %vm205 = vcmp.lt.f32.partialorder %v192, %v173
    %vm206 = vmor %vm202, %vm198
    %vm207 = vmor %vm203, %vm199
    %vm208 = vmor %vm204, %vm200
    %vm209 = vmor %vm205, %vm201
    %v210 = vsel %vm206, 1, 0
    %v211 = vsel %vm207, 1, 0
    %v212 = vsel %vm208, 1, 0
    %v213 = vsel %vm209, 1, 0
    %v214 = vcvt.s32.f32 %v210
    %v215 = vcvt.s32.f32 %v211
    %v216 = vcvt.s32.f32 %v212
    %v217 = vcvt.s32.f32 %v213
    %v218 = vsel %vm101, %v214, 0.0
    %v219 = vsel %vm101, %v215, 0.0
    %v220 = vadd.f32 %v218, %v219
    %v221 = vrot.slane %v220, 4
    %v222 = vadd.f32 %v220, %v221
    %v223 = vrot.slane %v222, 2
    %v224 = vadd.f32 %v222, %v223
    %v225 = vrot.slane %v224, 1
    %v226 = vadd.f32 %v224, %v225
    %v227 = vsel %vm101, %v216, 0.0
    %v228 = vsel %vm101, %v217, 0.0
    %v229 = vadd.f32 %v227, %v228
    %v230 = vrot.slane %v229, 4
    %v231 = vadd.f32 %v229, %v230
    %v232 = vrot.slane %v231, 2
    %v233 = vadd.f32 %v231, %v232
    %v234 = vrot.slane %v233, 1
    %v235 = vadd.f32 %v233, %v234
    %vm236 = vcmp.lt.f32.partialorder %v156, 5.0
    %vm237 = vcmp.lt.f32.partialorder %v157, 5.0
    %vm238 = vcmp.lt.f32.partialorder %v158, 5.0
    %vm239 = vcmp.lt.f32.partialorder %v159, 5.0
    %vm240 = vcmp.lt.f32.partialorder %v156, 15.0
    %vm241 = vcmp.lt.f32.partialorder %v157, 15.0
    %vm242 = vcmp.lt.f32.partialorder %v158, 15.0
    %vm243 = vcmp.lt.f32.partialorder %v159, 15.0
    %v244 = vadd.f32 %v144, 5.0
    %v245 = vadd.f32 %v153, 5.0
    %v246 = vadd.f32 %v226, 15.0
    %v247 = vadd.f32 %v235, 15.0
    %v248 = vsel %vm240, %v244, %v246
    %v249 = vsel %vm241, %v244, %v246
    %v250 = vsel %vm242, %v244, %v246
    %v251 = vsel %vm243, %v244, %v246
    %v252 = vsel %vm240, %v245, %v247
    %v253 = vsel %vm241, %v245, %v247
    %v254 = vsel %vm242, %v245, %v247
    %v255 = vsel %vm243, %v245, %v247
    %v256 = vsel %vm236, %v110, %v248
    %v257 = vsel %vm237, %v110, %v249
    %v258 = vsel %vm238, %v110, %v250
    %v259 = vsel %vm239, %v110, %v251
    %v260 = vsel %vm236, %v119, %v252
    %v261 = vsel %vm237, %v119, %v253
    %v262 = vsel %vm238, %v119, %v254
    %v263 = vsel %vm239, %v119, %v255
    %vm264 = vcmp.eq.f32.partialorder %v156, %v256
    %vm265 = vcmp.eq.f32.partialorder %v157, %v257
    %vm266 = vcmp.eq.f32.partialorder %v158, %v258
    %vm267 = vcmp.eq.f32.partialorder %v159, %v259
    %vm268 = vcmp.eq.f32.partialorder %v156, %v260
    %vm269 = vcmp.eq.f32.partialorder %v157, %v261
    %vm270 = vcmp.eq.f32.partialorder %v158, %v262
    %vm271 = vcmp.eq.f32.partialorder %v159, %v263
    %vm272 = vcmp.lt.f32.partialorder %v156, 25.0
    %vm273 = vcmp.lt.f32.partialorder %v157, 25.0
    %vm274 = vcmp.lt.f32.partialorder %v158, 25.0
    %vm275 = vcmp.lt.f32.partialorder %v159, 25.0
    %vm276 = vmand %vm264, %vm272
    %vm277 = vmand %vm265, %vm273
    %vm278 = vmand %vm266, %vm274
    %vm279 = vmand %vm267, %vm275
    %vm280 = vmand %vm268, %vm272
    %vm281 = vmand %vm269, %vm273
    %vm282 = vmand %vm270, %vm274
    %vm283 = vmand %vm271, %vm275
    %v284 = vsel %vm276, 1, 0
    %v285 = vsel %vm277, 1, 0
    %v286 = vsel %vm278, 1, 0
    %v287 = vsel %vm279, 1, 0
    %v288 = vsel %vm280, 1, 0
    %v289 = vsel %vm281, 1, 0
    %v290 = vsel %vm282, 1, 0
    %v291 = vsel %vm283, 1, 0
    %v292 = vcvt.s32.f32 %v284
    %v293 = vcvt.s32.f32 %v285
    %v294 = vcvt.s32.f32 %v286
    %v295 = vcvt.s32.f32 %v287
    %v296 = vcvt.s32.f32 %v288
    %v297 = vcvt.s32.f32 %v289
    %v298 = vcvt.s32.f32 %v290
    %v299 = vcvt.s32.f32 %v291
    %v301 = vsel %vm101, %v292, 0
    %v304 = vsel %vm101, %v293, 0
    %v307 = vsel %vm101, %v294, 0
    %v310 = vsel %vm101, %v295, 0
    %312 = vmatpush.msra.mxu0 0.0
    %313 = vmatpush.msra.mxu0 0.0
    %314 = vmatpush.msra.mxu0 0.0
    %315 = vmatpush.msra.mxu0 0.0
    %316 = vmatpush.msra.mxu0 0.0
    %317 = vmatpush.msra.mxu0 0.0
    %318 = vmatpush.msra.mxu0 0.0
    %319 = vmatpush.msra.mxu0 0.0
    %320 = vmatpush.msra.mxu0 0.0
    %321 = vmatpush.msra.mxu0 0.0
    %322 = vmatpush.msra.mxu0 0.0
    %323 = vmatpush.msra.mxu0 0.0
    %324 = vmatpush.msra.mxu0 0.0
    %325 = vmatpush.msra.mxu0 0.0
    %v326 = vand.u32 %v35, 4294901760
    %327 = vmatpush.msra.mxu0 %v326
    %v328 = vand.u32 %v34, 4294901760
    %329 = vmatpush.msra.mxu0 %v328
    %v330 = vand.u32 %v301, 4294901760
    %v331 = vsub.f32 %v301, %v330
    %v332 = vand.u32 %v331, 4294901760
    %v333 = vsub.f32 %v331, %v332
    %v334 = vand.u32 %v333, 4294901760
    %335 = vmatmul.f32.gmra.mxu0 %v334
    %v336 = vpop.f32.mrf.mxu0
    %v337 = vadd.f32 0.0, %v336
    %v338 = vand.u32 %v304, 4294901760
    %v339 = vsub.f32 %v304, %v338
    %v340 = vand.u32 %v339, 4294901760
    %v341 = vsub.f32 %v339, %v340
    %v342 = vand.u32 %v341, 4294901760
    %343 = vmatmul.f32.gmra.mxu0 %v342
    %v344 = vpop.f32.mrf.mxu0
    %v345 = vadd.f32 0.0, %v344
    %v346 = vand.u32 %v307, 4294901760
    %v347 = vsub.f32 %v307, %v346
    %v348 = vand.u32 %v347, 4294901760
    %v349 = vsub.f32 %v347, %v348
    %v350 = vand.u32 %v349, 4294901760
    %351 = vmatmul.f32.gmra.mxu0 %v350
    %v352 = vpop.f32.mrf.mxu0
    %v353 = vadd.f32 0.0, %v352
    %v354 = vand.u32 %v310, 4294901760
    %v355 = vsub.f32 %v310, %v354
    %v356 = vand.u32 %v355, 4294901760
    %v357 = vsub.f32 %v355, %v356
    %v358 = vand.u32 %v357, 4294901760
    %359 = vmatmul.f32.gmra.mxu0 %v358
    %v360 = vpop.f32.mrf.mxu0
    %v361 = vadd.f32 0.0, %v360
    %362 = vdwg.mxu0
    %363 = vmatpush.msra.mxu0 0.0
    %364 = vmatpush.msra.mxu0 0.0
    %365 = vmatpush.msra.mxu0 0.0
    %366 = vmatpush.msra.mxu0 0.0
    %367 = vmatpush.msra.mxu0 0.0
    %368 = vmatpush.msra.mxu0 0.0
    %369 = vmatpush.msra.mxu0 0.0
    %370 = vmatpush.msra.mxu0 0.0
    %371 = vmatpush.msra.mxu0 0.0
    %372 = vmatpush.msra.mxu0 0.0
    %373 = vmatpush.msra.mxu0 0.0
    %374 = vmatpush.msra.mxu0 0.0
    %375 = vmatpush.msra.mxu0 0.0
    %376 = vmatpush.msra.mxu0 0.0
    %v377 = vand.u32 %v35, 4294901760
    %v378 = vsub.f32 %v35, %v377
    %v379 = vand.u32 %v378, 4294901760
    %v380 = vsub.f32 %v378, %v379
    %v381 = vand.u32 %v380, 4294901760
    %382 = vmatpush.msra.mxu0 %v381
    %v383 = vand.u32 %v34, 4294901760
    %v384 = vsub.f32 %v34, %v383
    %v385 = vand.u32 %v384, 4294901760
    %v386 = vsub.f32 %v384, %v385
    %v387 = vand.u32 %v386, 4294901760
    %388 = vmatpush.msra.mxu0 %v387
    %v389 = vand.u32 %v301, 4294901760
    %390 = vmatmul.f32.gmra.mxu0 %v389
    %v391 = vpop.f32.mrf.mxu0
    %v392 = vadd.f32 %v337, %v391
    %v393 = vand.u32 %v304, 4294901760
    %394 = vmatmul.f32.gmra.mxu0 %v393
    %v395 = vpop.f32.mrf.mxu0
    %v396 = vadd.f32 %v345, %v395
    %v397 = vand.u32 %v307, 4294901760
    %398 = vmatmul.f32.gmra.mxu0 %v397
    %v399 = vpop.f32.mrf.mxu0
    %v400 = vadd.f32 %v353, %v399
    %v401 = vand.u32 %v310, 4294901760
    %402 = vmatmul.f32.gmra.mxu0 %v401
    %v403 = vpop.f32.mrf.mxu0
    %v404 = vadd.f32 %v361, %v403
    %405 = vdwg.mxu0
    %406 = vmatpush.msra.mxu0 0.0
    %407 = vmatpush.msra.mxu0 0.0
    %408 = vmatpush.msra.mxu0 0.0
    %409 = vmatpush.msra.mxu0 0.0
    %410 = vmatpush.msra.mxu0 0.0
    %411 = vmatpush.msra.mxu0 0.0
    %412 = vmatpush.msra.mxu0 0.0
    %413 = vmatpush.msra.mxu0 0.0
    %414 = vmatpush.msra.mxu0 0.0
    %415 = vmatpush.msra.mxu0 0.0
    %416 = vmatpush.msra.mxu0 0.0
    %417 = vmatpush.msra.mxu0 0.0
    %418 = vmatpush.msra.mxu0 0.0
    %419 = vmatpush.msra.mxu0 0.0
    %v420 = vand.u32 %v35, 4294901760
    %v421 = vsub.f32 %v35, %v420
    %422 = vmatpush.msra.mxu0 %v421
    %v423 = vand.u32 %v34, 4294901760
    %v424 = vsub.f32 %v34, %v423
    %425 = vmatpush.msra.mxu0 %v424
    %v426 = vand.u32 %v301, 4294901760
    %v427 = vsub.f32 %v301, %v426
    %428 = vmatmul.f32.gmra.mxu0 %v427
    %v429 = vpop.f32.mrf.mxu0
    %v430 = vadd.f32 %v392, %v429
    %v431 = vand.u32 %v304, 4294901760
    %v432 = vsub.f32 %v304, %v431
    %433 = vmatmul.f32.gmra.mxu0 %v432
    %v434 = vpop.f32.mrf.mxu0
    %v435 = vadd.f32 %v396, %v434
    %v436 = vand.u32 %v307, 4294901760
    %v437 = vsub.f32 %v307, %v436
    %438 = vmatmul.f32.gmra.mxu0 %v437
    %v439 = vpop.f32.mrf.mxu0
    %v440 = vadd.f32 %v400, %v439
    %v441 = vand.u32 %v310, 4294901760
    %v442 = vsub.f32 %v310, %v441
    %443 = vmatmul.f32.gmra.mxu0 %v442
    %v444 = vpop.f32.mrf.mxu0
    %v445 = vadd.f32 %v404, %v444
    %446 = vdwg.mxu0
    %447 = vmatpush.msra.mxu0 0.0
    %448 = vmatpush.msra.mxu0 0.0
    %449 = vmatpush.msra.mxu0 0.0
    %450 = vmatpush.msra.mxu0 0.0
    %451 = vmatpush.msra.mxu0 0.0
    %452 = vmatpush.msra.mxu0 0.0
    %453 = vmatpush.msra.mxu0 0.0
    %454 = vmatpush.msra.mxu0 0.0
    %455 = vmatpush.msra.mxu0 0.0
    %456 = vmatpush.msra.mxu0 0.0
    %457 = vmatpush.msra.mxu0 0.0
    %458 = vmatpush.msra.mxu0 0.0
    %459 = vmatpush.msra.mxu0 0.0
    %460 = vmatpush.msra.mxu0 0.0
    %v461 = vand.u32 %v35, 4294901760
    %462 = vmatpush.msra.mxu0 %v461
    %v463 = vand.u32 %v34, 4294901760
    %464 = vmatpush.msra.mxu0 %v463
    %v465 = vand.u32 %v301, 4294901760
    %v466 = vsub.f32 %v301, %v465
    %v467 = vand.u32 %v466, 4294901760
    %468 = vmatmul.f32.gmra.mxu0 %v467
    %v469 = vpop.f32.mrf.mxu0
    %v470 = vadd.f32 %v430, %v469
    %v471 = vand.u32 %v304, 4294901760
    %v472 = vsub.f32 %v304, %v471
    %v473 = vand.u32 %v472, 4294901760
    %474 = vmatmul.f32.gmra.mxu0 %v473
    %v475 = vpop.f32.mrf.mxu0
    %v476 = vadd.f32 %v435, %v475
    %v477 = vand.u32 %v307, 4294901760
    %v478 = vsub.f32 %v307, %v477
    %v479 = vand.u32 %v478, 4294901760
    %480 = vmatmul.f32.gmra.mxu0 %v479
    %v481 = vpop.f32.mrf.mxu0
    %v482 = vadd.f32 %v440, %v481
    %v483 = vand.u32 %v310, 4294901760
    %v484 = vsub.f32 %v310, %v483
    %v485 = vand.u32 %v484, 4294901760
    %486 = vmatmul.f32.gmra.mxu0 %v485
    %v487 = vpop.f32.mrf.mxu0
    %v488 = vadd.f32 %v445, %v487
    %489 = vdwg.mxu0
    %490 = vmatpush.msra.mxu0 0.0
    %491 = vmatpush.msra.mxu0 0.0
    %492 = vmatpush.msra.mxu0 0.0
    %493 = vmatpush.msra.mxu0 0.0
    %494 = vmatpush.msra.mxu0 0.0
    %495 = vmatpush.msra.mxu0 0.0
    %496 = vmatpush.msra.mxu0 0.0
    %497 = vmatpush.msra.mxu0 0.0
    %498 = vmatpush.msra.mxu0 0.0
    %499 = vmatpush.msra.mxu0 0.0
    %500 = vmatpush.msra.mxu0 0.0
    %501 = vmatpush.msra.mxu0 0.0
    %502 = vmatpush.msra.mxu0 0.0
    %503 = vmatpush.msra.mxu0 0.0
    %v504 = vand.u32 %v35, 4294901760
    %v505 = vsub.f32 %v35, %v504
    %v506 = vand.u32 %v505, 4294901760
    %507 = vmatpush.msra.mxu0 %v506
    %v508 = vand.u32 %v34, 4294901760
    %v509 = vsub.f32 %v34, %v508
    %v510 = vand.u32 %v509, 4294901760
    %511 = vmatpush.msra.mxu0 %v510
    %v512 = vand.u32 %v301, 4294901760
    %513 = vmatmul.f32.gmra.mxu0 %v512
    %v514 = vpop.f32.mrf.mxu0
    %v515 = vadd.f32 %v470, %v514
    %v516 = vand.u32 %v304, 4294901760
    %517 = vmatmul.f32.gmra.mxu0 %v516
    %v518 = vpop.f32.mrf.mxu0
    %v519 = vadd.f32 %v476, %v518
    %v520 = vand.u32 %v307, 4294901760
    %521 = vmatmul.f32.gmra.mxu0 %v520
    %v522 = vpop.f32.mrf.mxu0
    %v523 = vadd.f32 %v482, %v522
    %v524 = vand.u32 %v310, 4294901760
    %525 = vmatmul.f32.gmra.mxu0 %v524
    %v526 = vpop.f32.mrf.mxu0
    %v527 = vadd.f32 %v488, %v526
    %528 = vdwg.mxu0
    %529 = vmatpush.msra.mxu0 0.0
    %530 = vmatpush.msra.mxu0 0.0
    %531 = vmatpush.msra.mxu0 0.0
    %532 = vmatpush.msra.mxu0 0.0
    %533 = vmatpush.msra.mxu0 0.0
    %534 = vmatpush.msra.mxu0 0.0
    %535 = vmatpush.msra.mxu0 0.0
    %536 = vmatpush.msra.mxu0 0.0
    %537 = vmatpush.msra.mxu0 0.0
    %538 = vmatpush.msra.mxu0 0.0
    %539 = vmatpush.msra.mxu0 0.0
    %540 = vmatpush.msra.mxu0 0.0
    %541 = vmatpush.msra.mxu0 0.0
    %542 = vmatpush.msra.mxu0 0.0
    %v543 = vand.u32 %v35, 4294901760
    %544 = vmatpush.msra.mxu0 %v543
    %v545 = vand.u32 %v34, 4294901760
    %546 = vmatpush.msra.mxu0 %v545
    %v547 = vand.u32 %v301, 4294901760
    %548 = vmatmul.f32.gmra.mxu0 %v547
    %v549 = vpop.f32.mrf.mxu0
    %v550 = vadd.f32 %v515, %v549
    %v551 = vand.u32 %v304, 4294901760
    %552 = vmatmul.f32.gmra.mxu0 %v551
    %v553 = vpop.f32.mrf.mxu0
    %v554 = vadd.f32 %v519, %v553
    %v555 = vand.u32 %v307, 4294901760
    %556 = vmatmul.f32.gmra.mxu0 %v555
    %v557 = vpop.f32.mrf.mxu0
    %v558 = vadd.f32 %v523, %v557
    %v559 = vand.u32 %v310, 4294901760
    %560 = vmatmul.f32.gmra.mxu0 %v559
    %v561 = vpop.f32.mrf.mxu0
    %v562 = vadd.f32 %v527, %v561
    %563 = vdwg.mxu0
    %v565 = vsel %vm101, %v296, 0
    %v568 = vsel %vm101, %v297, 0
    %v571 = vsel %vm101, %v298, 0
    %v574 = vsel %vm101, %v299, 0
    %576 = vmatpush.msra.mxu0 0.0
    %577 = vmatpush.msra.mxu0 0.0
    %578 = vmatpush.msra.mxu0 0.0
    %579 = vmatpush.msra.mxu0 0.0
    %580 = vmatpush.msra.mxu0 0.0
    %581 = vmatpush.msra.mxu0 0.0
    %582 = vmatpush.msra.mxu0 0.0
    %583 = vmatpush.msra.mxu0 0.0
    %584 = vmatpush.msra.mxu0 0.0
    %585 = vmatpush.msra.mxu0 0.0
    %586 = vmatpush.msra.mxu0 0.0
    %587 = vmatpush.msra.mxu0 0.0
    %588 = vmatpush.msra.mxu0 0.0
    %589 = vmatpush.msra.mxu0 0.0
    %v590 = vand.u32 %v37, 4294901760
    %591 = vmatpush.msra.mxu0 %v590
    %v592 = vand.u32 %v36, 4294901760
    %593 = vmatpush.msra.mxu0 %v592
    %v594 = vand.u32 %v565, 4294901760
    %v595 = vsub.f32 %v565, %v594
    %v596 = vand.u32 %v595, 4294901760
    %v597 = vsub.f32 %v595, %v596
    %v598 = vand.u32 %v597, 4294901760
    %599 = vmatmul.f32.gmra.mxu0 %v598
    %v600 = vpop.f32.mrf.mxu0
    %v601 = vadd.f32 0.0, %v600
    %v602 = vand.u32 %v568, 4294901760
    %v603 = vsub.f32 %v568, %v602
    %v604 = vand.u32 %v603, 4294901760
    %v605 = vsub.f32 %v603, %v604
    %v606 = vand.u32 %v605, 4294901760
    %607 = vmatmul.f32.gmra.mxu0 %v606
    %v608 = vpop.f32.mrf.mxu0
    %v609 = vadd.f32 0.0, %v608
    %v610 = vand.u32 %v571, 4294901760
    %v611 = vsub.f32 %v571, %v610
    %v612 = vand.u32 %v611, 4294901760
    %v613 = vsub.f32 %v611, %v612
    %v614 = vand.u32 %v613, 4294901760
    %615 = vmatmul.f32.gmra.mxu0 %v614
    %v616 = vpop.f32.mrf.mxu0
    %v617 = vadd.f32 0.0, %v616
    %v618 = vand.u32 %v574, 4294901760
    %v619 = vsub.f32 %v574, %v618
    %v620 = vand.u32 %v619, 4294901760
    %v621 = vsub.f32 %v619, %v620
    %v622 = vand.u32 %v621, 4294901760
    %623 = vmatmul.f32.gmra.mxu0 %v622
    %v624 = vpop.f32.mrf.mxu0
    %v625 = vadd.f32 0.0, %v624
    %626 = vdwg.mxu0
    %627 = vmatpush.msra.mxu0 0.0
    %628 = vmatpush.msra.mxu0 0.0
    %629 = vmatpush.msra.mxu0 0.0
    %630 = vmatpush.msra.mxu0 0.0
    %631 = vmatpush.msra.mxu0 0.0
    %632 = vmatpush.msra.mxu0 0.0
    %633 = vmatpush.msra.mxu0 0.0
    %634 = vmatpush.msra.mxu0 0.0
    %635 = vmatpush.msra.mxu0 0.0
    %636 = vmatpush.msra.mxu0 0.0
    %637 = vmatpush.msra.mxu0 0.0
    %638 = vmatpush.msra.mxu0 0.0
    %639 = vmatpush.msra.mxu0 0.0
    %640 = vmatpush.msra.mxu0 0.0
    %v641 = vand.u32 %v37, 4294901760
    %v642 = vsub.f32 %v37, %v641
    %v643 = vand.u32 %v642, 4294901760
    %v644 = vsub.f32 %v642, %v643
    %v645 = vand.u32 %v644, 4294901760
    %646 = vmatpush.msra.mxu0 %v645
    %v647 = vand.u32 %v36, 4294901760
    %v648 = vsub.f32 %v36, %v647
    %v649 = vand.u32 %v648, 4294901760
    %v650 = vsub.f32 %v648, %v649
    %v651 = vand.u32 %v650, 4294901760
    %652 = vmatpush.msra.mxu0 %v651
    %v653 = vand.u32 %v565, 4294901760
    %654 = vmatmul.f32.gmra.mxu0 %v653
    %v655 = vpop.f32.mrf.mxu0
    %v656 = vadd.f32 %v601, %v655
    %v657 = vand.u32 %v568, 4294901760
    %658 = vmatmul.f32.gmra.mxu0 %v657
    %v659 = vpop.f32.mrf.mxu0
    %v660 = vadd.f32 %v609, %v659
    %v661 = vand.u32 %v571, 4294901760
    %662 = vmatmul.f32.gmra.mxu0 %v661
    %v663 = vpop.f32.mrf.mxu0
    %v664 = vadd.f32 %v617, %v663
    %v665 = vand.u32 %v574, 4294901760
    %666 = vmatmul.f32.gmra.mxu0 %v665
    %v667 = vpop.f32.mrf.mxu0
    %v668 = vadd.f32 %v625, %v667
    %669 = vdwg.mxu0
    %670 = vmatpush.msra.mxu0 0.0
    %671 = vmatpush.msra.mxu0 0.0
    %672 = vmatpush.msra.mxu0 0.0
    %673 = vmatpush.msra.mxu0 0.0
    %674 = vmatpush.msra.mxu0 0.0
    %675 = vmatpush.msra.mxu0 0.0
    %676 = vmatpush.msra.mxu0 0.0
    %677 = vmatpush.msra.mxu0 0.0
    %678 = vmatpush.msra.mxu0 0.0
    %679 = vmatpush.msra.mxu0 0.0
    %680 = vmatpush.msra.mxu0 0.0
    %681 = vmatpush.msra.mxu0 0.0
    %682 = vmatpush.msra.mxu0 0.0
    %683 = vmatpush.msra.mxu0 0.0
    %v684 = vand.u32 %v37, 4294901760
    %v685 = vsub.f32 %v37, %v684
    %686 = vmatpush.msra.mxu0 %v685
    %v687 = vand.u32 %v36, 4294901760
    %v688 = vsub.f32 %v36, %v687
    %689 = vmatpush.msra.mxu0 %v688
    %v690 = vand.u32 %v565, 4294901760
    %v691 = vsub.f32 %v565, %v690
    %692 = vmatmul.f32.gmra.mxu0 %v691
    %v693 = vpop.f32.mrf.mxu0
    %v694 = vadd.f32 %v656, %v693
    %v695 = vand.u32 %v568, 4294901760
    %v696 = vsub.f32 %v568, %v695
    %697 = vmatmul.f32.gmra.mxu0 %v696
    %v698 = vpop.f32.mrf.mxu0
    %v699 = vadd.f32 %v660, %v698
    %v700 = vand.u32 %v571, 4294901760
    %v701 = vsub.f32 %v571, %v700
    %702 = vmatmul.f32.gmra.mxu0 %v701
    %v703 = vpop.f32.mrf.mxu0
    %v704 = vadd.f32 %v664, %v703
    %v705 = vand.u32 %v574, 4294901760
    %v706 = vsub.f32 %v574, %v705
    %707 = vmatmul.f32.gmra.mxu0 %v706
    %v708 = vpop.f32.mrf.mxu0
    %v709 = vadd.f32 %v668, %v708
    %710 = vdwg.mxu0
    %711 = vmatpush.msra.mxu0 0.0
    %712 = vmatpush.msra.mxu0 0.0
    %713 = vmatpush.msra.mxu0 0.0
    %714 = vmatpush.msra.mxu0 0.0
    %715 = vmatpush.msra.mxu0 0.0
    %716 = vmatpush.msra.mxu0 0.0
    %717 = vmatpush.msra.mxu0 0.0
    %718 = vmatpush.msra.mxu0 0.0
    %719 = vmatpush.msra.mxu0 0.0
    %720 = vmatpush.msra.mxu0 0.0
    %721 = vmatpush.msra.mxu0 0.0
    %722 = vmatpush.msra.mxu0 0.0
    %723 = vmatpush.msra.mxu0 0.0
    %724 = vmatpush.msra.mxu0 0.0
    %v725 = vand.u32 %v37, 4294901760
    %726 = vmatpush.msra.mxu0 %v725
    %v727 = vand.u32 %v36, 4294901760
    %728 = vmatpush.msra.mxu0 %v727
    %v729 = vand.u32 %v565, 4294901760
    %v730 = vsub.f32 %v565, %v729
    %v731 = vand.u32 %v730, 4294901760
    %732 = vmatmul.f32.gmra.mxu0 %v731
    %v733 = vpop.f32.mrf.mxu0
    %v734 = vadd.f32 %v694, %v733
    %v735 = vand.u32 %v568, 4294901760
    %v736 = vsub.f32 %v568, %v735
    %v737 = vand.u32 %v736, 4294901760
    %738 = vmatmul.f32.gmra.mxu0 %v737
    %v739 = vpop.f32.mrf.mxu0
    %v740 = vadd.f32 %v699, %v739
    %v741 = vand.u32 %v571, 4294901760
    %v742 = vsub.f32 %v571, %v741
    %v743 = vand.u32 %v742, 4294901760
    %744 = vmatmul.f32.gmra.mxu0 %v743
    %v745 = vpop.f32.mrf.mxu0
    %v746 = vadd.f32 %v704, %v745
    %v747 = vand.u32 %v574, 4294901760
    %v748 = vsub.f32 %v574, %v747
    %v749 = vand.u32 %v748, 4294901760
    %750 = vmatmul.f32.gmra.mxu0 %v749
    %v751 = vpop.f32.mrf.mxu0
    %v752 = vadd.f32 %v709, %v751
    %753 = vdwg.mxu0
    %754 = vmatpush.msra.mxu0 0.0
    %755 = vmatpush.msra.mxu0 0.0
    %756 = vmatpush.msra.mxu0 0.0
    %757 = vmatpush.msra.mxu0 0.0
    %758 = vmatpush.msra.mxu0 0.0
    %759 = vmatpush.msra.mxu0 0.0
    %760 = vmatpush.msra.mxu0 0.0
    %761 = vmatpush.msra.mxu0 0.0
    %762 = vmatpush.msra.mxu0 0.0
    %763 = vmatpush.msra.mxu0 0.0
    %764 = vmatpush.msra.mxu0 0.0
    %765 = vmatpush.msra.mxu0 0.0
    %766 = vmatpush.msra.mxu0 0.0
    %767 = vmatpush.msra.mxu0 0.0
    %v768 = vand.u32 %v37, 4294901760
    %v769 = vsub.f32 %v37, %v768
    %v770 = vand.u32 %v769, 4294901760
    %771 = vmatpush.msra.mxu0 %v770
    %v772 = vand.u32 %v36, 4294901760
    %v773 = vsub.f32 %v36, %v772
    %v774 = vand.u32 %v773, 4294901760
    %775 = vmatpush.msra.mxu0 %v774
    %v776 = vand.u32 %v565, 4294901760
    %777 = vmatmul.f32.gmra.mxu0 %v776
    %v778 = vpop.f32.mrf.mxu0
    %v779 = vadd.f32 %v734, %v778
    %v780 = vand.u32 %v568, 4294901760
    %781 = vmatmul.f32.gmra.mxu0 %v780
    %v782 = vpop.f32.mrf.mxu0
    %v783 = vadd.f32 %v740, %v782
    %v784 = vand.u32 %v571, 4294901760
    %785 = vmatmul.f32.gmra.mxu0 %v784
    %v786 = vpop.f32.mrf.mxu0
    %v787 = vadd.f32 %v746, %v786
    %v788 = vand.u32 %v574, 4294901760
    %789 = vmatmul.f32.gmra.mxu0 %v788
    %v790 = vpop.f32.mrf.mxu0
    %v791 = vadd.f32 %v752, %v790
    %792 = vdwg.mxu0
    %793 = vmatpush.msra.mxu0 0.0
    %794 = vmatpush.msra.mxu0 0.0
    %795 = vmatpush.msra.mxu0 0.0
    %796 = vmatpush.msra.mxu0 0.0
    %797 = vmatpush.msra.mxu0 0.0
    %798 = vmatpush.msra.mxu0 0.0
    %799 = vmatpush.msra.mxu0 0.0
    %800 = vmatpush.msra.mxu0 0.0
    %801 = vmatpush.msra.mxu0 0.0
    %802 = vmatpush.msra.mxu0 0.0
    %803 = vmatpush.msra.mxu0 0.0
    %804 = vmatpush.msra.mxu0 0.0
    %805 = vmatpush.msra.mxu0 0.0
    %806 = vmatpush.msra.mxu0 0.0
    %v807 = vand.u32 %v37, 4294901760
    %808 = vmatpush.msra.mxu0 %v807
    %v809 = vand.u32 %v36, 4294901760
    %810 = vmatpush.msra.mxu0 %v809
    %v811 = vand.u32 %v565, 4294901760
    %812 = vmatmul.f32.gmra.mxu0 %v811
    %v813 = vpop.f32.mrf.mxu0
    %v814 = vadd.f32 %v779, %v813
    %v815 = vand.u32 %v568, 4294901760
    %816 = vmatmul.f32.gmra.mxu0 %v815
    %v817 = vpop.f32.mrf.mxu0
    %v818 = vadd.f32 %v783, %v817
    %v819 = vand.u32 %v571, 4294901760
    %820 = vmatmul.f32.gmra.mxu0 %v819
    %v821 = vpop.f32.mrf.mxu0
    %v822 = vadd.f32 %v787, %v821
    %v823 = vand.u32 %v574, 4294901760
    %824 = vmatmul.f32.gmra.mxu0 %v823
    %v825 = vpop.f32.mrf.mxu0
    %v826 = vadd.f32 %v791, %v825
    %827 = vdwg.mxu0
    %v829 = vsel %vm101, %v38, 0
    %831 = vmatpush.xpose.msra.mxu0 0.0
    %832 = vmatpush.xpose.msra.mxu0 0.0
    %833 = vmatpush.xpose.msra.mxu0 0.0
    %834 = vmatpush.xpose.msra.mxu0 0.0
    %835 = vmatpush.xpose.msra.mxu0 0.0
    %836 = vmatpush.xpose.msra.mxu0 0.0
    %837 = vmatpush.xpose.msra.mxu0 0.0
    %838 = vmatpush.xpose.msra.mxu0 0.0
    %839 = vmatpush.xpose.msra.mxu0 0.0
    %840 = vmatpush.xpose.msra.mxu0 0.0
    %841 = vmatpush.xpose.msra.mxu0 0.0
    %842 = vmatpush.xpose.msra.mxu0 0.0
    %v843 = vand.u32 %v310, 4294901760
    %844 = vmatpush.xpose.msra.mxu0 %v843
    %v845 = vand.u32 %v307, 4294901760
    %846 = vmatpush.xpose.msra.mxu0 %v845
    %v847 = vand.u32 %v304, 4294901760
    %848 = vmatpush.xpose.msra.mxu0 %v847
    %v849 = vand.u32 %v301, 4294901760
    %850 = vmatpush.xpose.msra.mxu0 %v849
    %v851 = vand.u32 %v829, 4294901760
    %v852 = vsub.f32 %v829, %v851
    %v853 = vand.u32 %v852, 4294901760
    %v854 = vsub.f32 %v852, %v853
    %v855 = vand.u32 %v854, 4294901760
    %856 = vmatmul.f32.gmra.mxu0 %v855
    %v857 = vpop.f32.mrf.mxu0
    %v858 = vadd.f32 0.0, %v857
    %859 = vdwg.mxu0
    %860 = vmatpush.xpose.msra.mxu0 0.0
    %861 = vmatpush.xpose.msra.mxu0 0.0
    %862 = vmatpush.xpose.msra.mxu0 0.0
    %863 = vmatpush.xpose.msra.mxu0 0.0
    %864 = vmatpush.xpose.msra.mxu0 0.0
    %865 = vmatpush.xpose.msra.mxu0 0.0
    %866 = vmatpush.xpose.msra.mxu0 0.0
    %867 = vmatpush.xpose.msra.mxu0 0.0
    %868 = vmatpush.xpose.msra.mxu0 0.0
    %869 = vmatpush.xpose.msra.mxu0 0.0
    %870 = vmatpush.xpose.msra.mxu0 0.0
    %871 = vmatpush.xpose.msra.mxu0 0.0
    %v872 = vand.u32 %v310, 4294901760
    %v873 = vsub.f32 %v310, %v872
    %v874 = vand.u32 %v873, 4294901760
    %v875 = vsub.f32 %v873, %v874
    %v876 = vand.u32 %v875, 4294901760
    %877 = vmatpush.xpose.msra.mxu0 %v876
    %v878 = vand.u32 %v307, 4294901760
    %v879 = vsub.f32 %v307, %v878
    %v880 = vand.u32 %v879, 4294901760
    %v881 = vsub.f32 %v879, %v880
    %v882 = vand.u32 %v881, 4294901760
    %883 = vmatpush.xpose.msra.mxu0 %v882
    %v884 = vand.u32 %v304, 4294901760
    %v885 = vsub.f32 %v304, %v884
    %v886 = vand.u32 %v885, 4294901760
    %v887 = vsub.f32 %v885, %v886
    %v888 = vand.u32 %v887, 4294901760
    %889 = vmatpush.xpose.msra.mxu0 %v888
    %v890 = vand.u32 %v301, 4294901760
    %v891 = vsub.f32 %v301, %v890
    %v892 = vand.u32 %v891, 4294901760
    %v893 = vsub.f32 %v891, %v892
    %v894 = vand.u32 %v893, 4294901760
    %895 = vmatpush.xpose.msra.mxu0 %v894
    %v896 = vand.u32 %v829, 4294901760
    %897 = vmatmul.f32.gmra.mxu0 %v896
    %v898 = vpop.f32.mrf.mxu0
    %v899 = vadd.f32 %v858, %v898
    %900 = vdwg.mxu0
    %901 = vmatpush.xpose.msra.mxu0 0.0
    %902 = vmatpush.xpose.msra.mxu0 0.0
    %903 = vmatpush.xpose.msra.mxu0 0.0
    %904 = vmatpush.xpose.msra.mxu0 0.0
    %905 = vmatpush.xpose.msra.mxu0 0.0
    %906 = vmatpush.xpose.msra.mxu0 0.0
    %907 = vmatpush.xpose.msra.mxu0 0.0
    %908 = vmatpush.xpose.msra.mxu0 0.0
    %909 = vmatpush.xpose.msra.mxu0 0.0
    %910 = vmatpush.xpose.msra.mxu0 0.0
    %911 = vmatpush.xpose.msra.mxu0 0.0
    %912 = vmatpush.xpose.msra.mxu0 0.0
    %v913 = vand.u32 %v310, 4294901760
    %v914 = vsub.f32 %v310, %v913
    %915 = vmatpush.xpose.msra.mxu0 %v914
    %v916 = vand.u32 %v307, 4294901760
    %v917 = vsub.f32 %v307, %v916
    %918 = vmatpush.xpose.msra.mxu0 %v917
    %v919 = vand.u32 %v304, 4294901760
    %v920 = vsub.f32 %v304, %v919
    %921 = vmatpush.xpose.msra.mxu0 %v920
    %v922 = vand.u32 %v301, 4294901760
    %v923 = vsub.f32 %v301, %v922
    %924 = vmatpush.xpose.msra.mxu0 %v923
    %v925 = vand.u32 %v829, 4294901760
    %v926 = vsub.f32 %v829, %v925
    %927 = vmatmul.f32.gmra.mxu0 %v926
    %v928 = vpop.f32.mrf.mxu0
    %v929 = vadd.f32 %v899, %v928
    %930 = vdwg.mxu0
    %931 = vmatpush.xpose.msra.mxu0 0.0
    %932 = vmatpush.xpose.msra.mxu0 0.0
    %933 = vmatpush.xpose.msra.mxu0 0.0
    %934 = vmatpush.xpose.msra.mxu0 0.0
    %935 = vmatpush.xpose.msra.mxu0 0.0
    %936 = vmatpush.xpose.msra.mxu0 0.0
    %937 = vmatpush.xpose.msra.mxu0 0.0
    %938 = vmatpush.xpose.msra.mxu0 0.0
    %939 = vmatpush.xpose.msra.mxu0 0.0
    %940 = vmatpush.xpose.msra.mxu0 0.0
    %941 = vmatpush.xpose.msra.mxu0 0.0
    %942 = vmatpush.xpose.msra.mxu0 0.0
    %v943 = vand.u32 %v310, 4294901760
    %944 = vmatpush.xpose.msra.mxu0 %v943
    %v945 = vand.u32 %v307, 4294901760
    %946 = vmatpush.xpose.msra.mxu0 %v945
    %v947 = vand.u32 %v304, 4294901760
    %948 = vmatpush.xpose.msra.mxu0 %v947
    %v949 = vand.u32 %v301, 4294901760
    %950 = vmatpush.xpose.msra.mxu0 %v949
    %v951 = vand.u32 %v829, 4294901760
    %v952 = vsub.f32 %v829, %v951
    %v953 = vand.u32 %v952, 4294901760
    %954 = vmatmul.f32.gmra.mxu0 %v953
    %v955 = vpop.f32.mrf.mxu0
    %v956 = vadd.f32 %v929, %v955
    %957 = vdwg.mxu0
    %958 = vmatpush.xpose.msra.mxu0 0.0
    %959 = vmatpush.xpose.msra.mxu0 0.0
    %960 = vmatpush.xpose.msra.mxu0 0.0
    %961 = vmatpush.xpose.msra.mxu0 0.0
    %962 = vmatpush.xpose.msra.mxu0 0.0
    %963 = vmatpush.xpose.msra.mxu0 0.0
    %964 = vmatpush.xpose.msra.mxu0 0.0
    %965 = vmatpush.xpose.msra.mxu0 0.0
    %966 = vmatpush.xpose.msra.mxu0 0.0
    %967 = vmatpush.xpose.msra.mxu0 0.0
    %968 = vmatpush.xpose.msra.mxu0 0.0
    %969 = vmatpush.xpose.msra.mxu0 0.0
    %v970 = vand.u32 %v310, 4294901760
    %v971 = vsub.f32 %v310, %v970
    %v972 = vand.u32 %v971, 4294901760
    %973 = vmatpush.xpose.msra.mxu0 %v972
    %v974 = vand.u32 %v307, 4294901760
    %v975 = vsub.f32 %v307, %v974
    %v976 = vand.u32 %v975, 4294901760
    %977 = vmatpush.xpose.msra.mxu0 %v976
    %v978 = vand.u32 %v304, 4294901760
    %v979 = vsub.f32 %v304, %v978
    %v980 = vand.u32 %v979, 4294901760
    %981 = vmatpush.xpose.msra.mxu0 %v980
    %v982 = vand.u32 %v301, 4294901760
    %v983 = vsub.f32 %v301, %v982
    %v984 = vand.u32 %v983, 4294901760
    %985 = vmatpush.xpose.msra.mxu0 %v984
    %v986 = vand.u32 %v829, 4294901760
    %987 = vmatmul.f32.gmra.mxu0 %v986
    %v988 = vpop.f32.mrf.mxu0
    %v989 = vadd.f32 %v956, %v988
    %990 = vdwg.mxu0
    %991 = vmatpush.xpose.msra.mxu0 0.0
    %992 = vmatpush.xpose.msra.mxu0 0.0
    %993 = vmatpush.xpose.msra.mxu0 0.0
    %994 = vmatpush.xpose.msra.mxu0 0.0
    %995 = vmatpush.xpose.msra.mxu0 0.0
    %996 = vmatpush.xpose.msra.mxu0 0.0
    %997 = vmatpush.xpose.msra.mxu0 0.0
    %998 = vmatpush.xpose.msra.mxu0 0.0
    %999 = vmatpush.xpose.msra.mxu0 0.0
    %1000 = vmatpush.xpose.msra.mxu0 0.0
    %1001 = vmatpush.xpose.msra.mxu0 0.0
    %1002 = vmatpush.xpose.msra.mxu0 0.0
    %v1003 = vand.u32 %v310, 4294901760
    %1004 = vmatpush.xpose.msra.mxu0 %v1003
    %v1005 = vand.u32 %v307, 4294901760
    %1006 = vmatpush.xpose.msra.mxu0 %v1005
    %v1007 = vand.u32 %v304, 4294901760
    %1008 = vmatpush.xpose.msra.mxu0 %v1007
    %v1009 = vand.u32 %v301, 4294901760
    %1010 = vmatpush.xpose.msra.mxu0 %v1009
    %v1011 = vand.u32 %v829, 4294901760
    %1012 = vmatmul.f32.gmra.mxu0 %v1011
    %v1013 = vpop.f32.mrf.mxu0
    %v1014 = vadd.f32 %v989, %v1013
    %1015 = vdwg.mxu0
    %v1017 = vsel %vm101, %v39, 0
    %1019 = vmatpush.xpose.msra.mxu0 0.0
    %1020 = vmatpush.xpose.msra.mxu0 0.0
    %1021 = vmatpush.xpose.msra.mxu0 0.0
    %1022 = vmatpush.xpose.msra.mxu0 0.0
    %1023 = vmatpush.xpose.msra.mxu0 0.0
    %1024 = vmatpush.xpose.msra.mxu0 0.0
    %1025 = vmatpush.xpose.msra.mxu0 0.0
    %1026 = vmatpush.xpose.msra.mxu0 0.0
    %1027 = vmatpush.xpose.msra.mxu0 0.0
    %1028 = vmatpush.xpose.msra.mxu0 0.0
    %1029 = vmatpush.xpose.msra.mxu0 0.0
    %1030 = vmatpush.xpose.msra.mxu0 0.0
    %v1031 = vand.u32 %v574, 4294901760
    %1032 = vmatpush.xpose.msra.mxu0 %v1031
    %v1033 = vand.u32 %v571, 4294901760
    %1034 = vmatpush.xpose.msra.mxu0 %v1033
    %v1035 = vand.u32 %v568, 4294901760
    %1036 = vmatpush.xpose.msra.mxu0 %v1035
    %v1037 = vand.u32 %v565, 4294901760
    %1038 = vmatpush.xpose.msra.mxu0 %v1037
    %v1039 = vand.u32 %v1017, 4294901760
    %v1040 = vsub.f32 %v1017, %v1039
    %v1041 = vand.u32 %v1040, 4294901760
    %v1042 = vsub.f32 %v1040, %v1041
    %v1043 = vand.u32 %v1042, 4294901760
    %1044 = vmatmul.f32.gmra.mxu0 %v1043
    %v1045 = vpop.f32.mrf.mxu0
    %v1046 = vadd.f32 0.0, %v1045
    %1047 = vdwg.mxu0
    %1048 = vmatpush.xpose.msra.mxu0 0.0
    %1049 = vmatpush.xpose.msra.mxu0 0.0
    %1050 = vmatpush.xpose.msra.mxu0 0.0
    %1051 = vmatpush.xpose.msra.mxu0 0.0
    %1052 = vmatpush.xpose.msra.mxu0 0.0
    %1053 = vmatpush.xpose.msra.mxu0 0.0
    %1054 = vmatpush.xpose.msra.mxu0 0.0
    %1055 = vmatpush.xpose.msra.mxu0 0.0
    %1056 = vmatpush.xpose.msra.mxu0 0.0
    %1057 = vmatpush.xpose.msra.mxu0 0.0
    %1058 = vmatpush.xpose.msra.mxu0 0.0
    %1059 = vmatpush.xpose.msra.mxu0 0.0
    %v1060 = vand.u32 %v574, 4294901760
    %v1061 = vsub.f32 %v574, %v1060
    %v1062 = vand.u32 %v1061, 4294901760
    %v1063 = vsub.f32 %v1061, %v1062
    %v1064 = vand.u32 %v1063, 4294901760
    %1065 = vmatpush.xpose.msra.mxu0 %v1064
    %v1066 = vand.u32 %v571, 4294901760
    %v1067 = vsub.f32 %v571, %v1066
    %v1068 = vand.u32 %v1067, 4294901760
    %v1069 = vsub.f32 %v1067, %v1068
    %v1070 = vand.u32 %v1069, 4294901760
    %1071 = vmatpush.xpose.msra.mxu0 %v1070
    %v1072 = vand.u32 %v568, 4294901760
    %v1073 = vsub.f32 %v568, %v1072
    %v1074 = vand.u32 %v1073, 4294901760
    %v1075 = vsub.f32 %v1073, %v1074
    %v1076 = vand.u32 %v1075, 4294901760
    %1077 = vmatpush.xpose.msra.mxu0 %v1076
    %v1078 = vand.u32 %v565, 4294901760
    %v1079 = vsub.f32 %v565, %v1078
    %v1080 = vand.u32 %v1079, 4294901760
    %v1081 = vsub.f32 %v1079, %v1080
    %v1082 = vand.u32 %v1081, 4294901760
    %1083 = vmatpush.xpose.msra.mxu0 %v1082
    %v1084 = vand.u32 %v1017, 4294901760
    %1085 = vmatmul.f32.gmra.mxu0 %v1084
    %v1086 = vpop.f32.mrf.mxu0
    %v1087 = vadd.f32 %v1046, %v1086
    %1088 = vdwg.mxu0
    %1089 = vmatpush.xpose.msra.mxu0 0.0
    %1090 = vmatpush.xpose.msra.mxu0 0.0
    %1091 = vmatpush.xpose.msra.mxu0 0.0
    %1092 = vmatpush.xpose.msra.mxu0 0.0
    %1093 = vmatpush.xpose.msra.mxu0 0.0
    %1094 = vmatpush.xpose.msra.mxu0 0.0
    %1095 = vmatpush.xpose.msra.mxu0 0.0
    %1096 = vmatpush.xpose.msra.mxu0 0.0
    %1097 = vmatpush.xpose.msra.mxu0 0.0
    %1098 = vmatpush.xpose.msra.mxu0 0.0
    %1099 = vmatpush.xpose.msra.mxu0 0.0
    %1100 = vmatpush.xpose.msra.mxu0 0.0
    %v1101 = vand.u32 %v574, 4294901760
    %v1102 = vsub.f32 %v574, %v1101
    %1103 = vmatpush.xpose.msra.mxu0 %v1102
    %v1104 = vand.u32 %v571, 4294901760
    %v1105 = vsub.f32 %v571, %v1104
    %1106 = vmatpush.xpose.msra.mxu0 %v1105
    %v1107 = vand.u32 %v568, 4294901760
    %v1108 = vsub.f32 %v568, %v1107
    %1109 = vmatpush.xpose.msra.mxu0 %v1108
    %v1110 = vand.u32 %v565, 4294901760
    %v1111 = vsub.f32 %v565, %v1110
    %1112 = vmatpush.xpose.msra.mxu0 %v1111
    %v1113 = vand.u32 %v1017, 4294901760
    %v1114 = vsub.f32 %v1017, %v1113
    %1115 = vmatmul.f32.gmra.mxu0 %v1114
    %v1116 = vpop.f32.mrf.mxu0
    %v1117 = vadd.f32 %v1087, %v1116
    %1118 = vdwg.mxu0
    %1119 = vmatpush.xpose.msra.mxu0 0.0
    %1120 = vmatpush.xpose.msra.mxu0 0.0
    %1121 = vmatpush.xpose.msra.mxu0 0.0
    %1122 = vmatpush.xpose.msra.mxu0 0.0
    %1123 = vmatpush.xpose.msra.mxu0 0.0
    %1124 = vmatpush.xpose.msra.mxu0 0.0
    %1125 = vmatpush.xpose.msra.mxu0 0.0
    %1126 = vmatpush.xpose.msra.mxu0 0.0
    %1127 = vmatpush.xpose.msra.mxu0 0.0
    %1128 = vmatpush.xpose.msra.mxu0 0.0
    %1129 = vmatpush.xpose.msra.mxu0 0.0
    %1130 = vmatpush.xpose.msra.mxu0 0.0
    %v1131 = vand.u32 %v574, 4294901760
    %1132 = vmatpush.xpose.msra.mxu0 %v1131
    %v1133 = vand.u32 %v571, 4294901760
    %1134 = vmatpush.xpose.msra.mxu0 %v1133
    %v1135 = vand.u32 %v568, 4294901760
    %1136 = vmatpush.xpose.msra.mxu0 %v1135
    %v1137 = vand.u32 %v565, 4294901760
    %1138 = vmatpush.xpose.msra.mxu0 %v1137
    %v1139 = vand.u32 %v1017, 4294901760
    %v1140 = vsub.f32 %v1017, %v1139
    %v1141 = vand.u32 %v1140, 4294901760
    %1142 = vmatmul.f32.gmra.mxu0 %v1141
    %v1143 = vpop.f32.mrf.mxu0
    %v1144 = vadd.f32 %v1117, %v1143
    %1145 = vdwg.mxu0
    %1146 = vmatpush.xpose.msra.mxu0 0.0
    %1147 = vmatpush.xpose.msra.mxu0 0.0
    %1148 = vmatpush.xpose.msra.mxu0 0.0
    %1149 = vmatpush.xpose.msra.mxu0 0.0
    %1150 = vmatpush.xpose.msra.mxu0 0.0
    %1151 = vmatpush.xpose.msra.mxu0 0.0
    %1152 = vmatpush.xpose.msra.mxu0 0.0
    %1153 = vmatpush.xpose.msra.mxu0 0.0
    %1154 = vmatpush.xpose.msra.mxu0 0.0
    %1155 = vmatpush.xpose.msra.mxu0 0.0
    %1156 = vmatpush.xpose.msra.mxu0 0.0
    %1157 = vmatpush.xpose.msra.mxu0 0.0
    %v1158 = vand.u32 %v574, 4294901760
    %v1159 = vsub.f32 %v574, %v1158
    %v1160 = vand.u32 %v1159, 4294901760
    %1161 = vmatpush.xpose.msra.mxu0 %v1160
    %v1162 = vand.u32 %v571, 4294901760
    %v1163 = vsub.f32 %v571, %v1162
    %v1164 = vand.u32 %v1163, 4294901760
    %1165 = vmatpush.xpose.msra.mxu0 %v1164
    %v1166 = vand.u32 %v568, 4294901760
    %v1167 = vsub.f32 %v568, %v1166
    %v1168 = vand.u32 %v1167, 4294901760
    %1169 = vmatpush.xpose.msra.mxu0 %v1168
    %v1170 = vand.u32 %v565, 4294901760
    %v1171 = vsub.f32 %v565, %v1170
    %v1172 = vand.u32 %v1171, 4294901760
    %1173 = vmatpush.xpose.msra.mxu0 %v1172
    %v1174 = vand.u32 %v1017, 4294901760
    %1175 = vmatmul.f32.gmra.mxu0 %v1174
    %v1176 = vpop.f32.mrf.mxu0
    %v1177 = vadd.f32 %v1144, %v1176
    %1178 = vdwg.mxu0
    %1179 = vmatpush.xpose.msra.mxu0 0.0
    %1180 = vmatpush.xpose.msra.mxu0 0.0
    %1181 = vmatpush.xpose.msra.mxu0 0.0
    %1182 = vmatpush.xpose.msra.mxu0 0.0
    %1183 = vmatpush.xpose.msra.mxu0 0.0
    %1184 = vmatpush.xpose.msra.mxu0 0.0
    %1185 = vmatpush.xpose.msra.mxu0 0.0
    %1186 = vmatpush.xpose.msra.mxu0 0.0
    %1187 = vmatpush.xpose.msra.mxu0 0.0
    %1188 = vmatpush.xpose.msra.mxu0 0.0
    %1189 = vmatpush.xpose.msra.mxu0 0.0
    %1190 = vmatpush.xpose.msra.mxu0 0.0
    %v1191 = vand.u32 %v574, 4294901760
    %1192 = vmatpush.xpose.msra.mxu0 %v1191
    %v1193 = vand.u32 %v571, 4294901760
    %1194 = vmatpush.xpose.msra.mxu0 %v1193
    %v1195 = vand.u32 %v568, 4294901760
    %1196 = vmatpush.xpose.msra.mxu0 %v1195
    %v1197 = vand.u32 %v565, 4294901760
    %1198 = vmatpush.xpose.msra.mxu0 %v1197
    %v1199 = vand.u32 %v1017, 4294901760
    %1200 = vmatmul.f32.gmra.mxu0 %v1199
    %v1201 = vpop.f32.mrf.mxu0
    %v1202 = vadd.f32 %v1177, %v1201
    %1203 = vdwg.mxu0
    %vm1204 = vcmask 261120
    %1205 = vst.msk [vmem:[#allocation5] sm:$0xff] %vm1204, %v550
    %1206 = vst.msk [vmem:[#allocation5 + $0x8] sm:$0xff] %vm1204, %v554
    %1207 = vst.msk [vmem:[#allocation5 + $0x10] sm:$0xff] %vm1204, %v558
    %1208 = vst.msk [vmem:[#allocation5 + $0x18] sm:$0xff] %vm1204, %v562
    %1209 = vst.msk [vmem:[#allocation5 + $0x20] sm:$0xff] %vm1204, %v814
    %1210 = vst.msk [vmem:[#allocation5 + $0x28] sm:$0xff] %vm1204, %v818
    %1211 = vst.msk [vmem:[#allocation5 + $0x30] sm:$0xff] %vm1204, %v822
    %1212 = vst.msk [vmem:[#allocation5 + $0x38] sm:$0xff] %vm1204, %v826
    %vm1213 = vcmask 254976
    %1214 = vst.msk [vmem:[#allocation6] sm:$0x3] %vm1213, %v1014
    %1215 = vst.msk [vmem:[#allocation6 + $0x2] sm:$0x3] %vm1213, %v1202
    // Predicated region
    $region18: #{tpu_custom_call.1} parent=1 // pred_check
      _
    $region19: #{tpu_custom_call.1} parent=1 // pred_check_branch
      %1217 = sbr.rel (0) target = $region21
    $region20: #{tpu_custom_call.1} parent=1 // pred_region
      %1219 = vsyncadd [#allocation4], 0
      %s1220 = sshll.u32 [#allocation5], 4
      %s1221 = int_to_ptr.vmem [resolvable:$true] %s1220
      %s1222 = sshll.u32 %s3, 4
      %s1223 = int_to_ptr.hbm [resolvable:$true] %s1222
      %1228 = dma.vmem_to_hbm [thread:$0]  %s1221, 1024, %s1223, [#allocation4], 128, 128, 8
    $region21: #{tpu_custom_call.1} parent=1 // pred_fallthru
      _
    // Predicated region
    $region22: #{tpu_custom_call.1} parent=1 // pred_check
      _
    $region23: #{tpu_custom_call.1} parent=1 // pred_check_branch
      %1230 = sbr.rel (0) target = $region25
    $region24: #{tpu_custom_call.1} parent=1 // pred_region
      %1232 = vsyncadd [#allocation7], 0
      %s1233 = sshll.u32 [#allocation6], 4
      %s1234 = int_to_ptr.vmem [resolvable:$true] %s1233
      %s1235 = sshll.u32 %s4, 4
      %s1236 = int_to_ptr.hbm [resolvable:$true] %s1235
      %1241 = dma.vmem_to_hbm [thread:$0]  %s1234, 64, %s1236, [#allocation7], 32, 32, 2
    $region25: #{tpu_custom_call.1} parent=1 // pred_fallthru
      _
    // Predicated region
    $region26: #{tpu_custom_call.1} parent=1 // pred_check
      _
    $region27: #{tpu_custom_call.1} parent=1 // pred_check_branch
      %1243 = sbr.rel (0) target = $region29
    $region28: #{tpu_custom_call.1} parent=1 // pred_region
      %1245 = dma.done [#allocation4], 1024
    $region29: #{tpu_custom_call.1} parent=1 // pred_fallthru
      _
    // Predicated region
    $region30: #{tpu_custom_call.1} parent=1 // pred_check
      _
    $region31: #{tpu_custom_call.1} parent=1 // pred_check_branch
      %1247 = sbr.rel (0) target = $region33
    $region32: #{tpu_custom_call.1} parent=1 // pred_region
      %1249 = dma.done [#allocation7], 64
    $region33: #{tpu_custom_call.1} parent=1 // pred_fallthru
      _
    %1250 = vsyncpa [#allocation3], 1
    %1251 = vsyncpa [#allocation4], 1
    %1252 = vsyncpa [#allocation7], 1

</llo_original>
